<compile_context>
chip_gen: v5e
topology: v5e:2x2
jax: 0.10.0
libtpu: 0.0.40
codegen_flags: <defaults>
</compile_context>

<pallas_src>
import functools
import math

import jax
import jax.numpy as jnp
from jax.experimental import pallas as pl
from jax.experimental.pallas import tpu as pltpu


# ----------------------------- kernel -------------------------------------- #

def fused_attention_kernel(qx_ref, kx_ref, vx_ref, w_ref, b_ref,
                           out_ref, attn_ref, *, n, lq, lk, e, scale):
    # qx_ref: (N*Lq, E), kx_ref/vx_ref: (N*Lk, E)  -- batch folded into rows.
    # w_ref : (E, 3E) = [Wq^T | Wk^T | Wv^T] in (in, out) layout.
    # b_ref : (1, 3E) = [bq | bk | bv].
    f32 = jnp.float32

    w = w_ref[...].astype(f32)                                   # (E, 3E)
    b = b_ref[...].astype(f32)                                   # (1, 3E)

    # --- projections (MXU) + bias, batch folded into the M dimension ---
    q = jnp.dot(qx_ref[...], w[:, 0 * e:1 * e],
                preferred_element_type=f32) + b[:, 0 * e:1 * e]   # (N*Lq, E)
    k = jnp.dot(kx_ref[...], w[:, 1 * e:2 * e],
                preferred_element_type=f32) + b[:, 1 * e:2 * e]   # (N*Lk, E)
    v = jnp.dot(vx_ref[...], w[:, 2 * e:3 * e],
                preferred_element_type=f32) + b[:, 2 * e:3 * e]   # (N*Lk, E)

    # --- restore the batch axis (leading-dim split, last dim unchanged: free) ---
    qb = q.reshape(n, lq, e)
    kb = k.reshape(n, lk, e)
    vb = v.reshape(n, lk, e)

    # --- scaled dot-product scores (batched MXU matmul) ---
    scores = jnp.einsum('bqd,bkd->bqk', qb, kb,
                        preferred_element_type=f32) * scale       # (N, Lq, Lk)

    # --- stable softmax over the key axis; normalization via pl.reciprocal ---
    m = jnp.max(scores, axis=-1, keepdims=True)
    p = jnp.exp(scores - m)
    denom = jnp.sum(p, axis=-1, keepdims=True)
    weights = p * pl.reciprocal(denom, approx=False)              # (N, Lq, Lk)

    # --- attention output (batched MXU matmul) ---
    out = jnp.einsum('bqk,bkd->bqd', weights, vb,
                     preferred_element_type=f32)                  # (N, Lq, E)

    # Fold batch back into rows for the store (leading-dim merge: free).
    out_ref[...] = out.reshape(n * lq, e).astype(out_ref.dtype)
    attn_ref[...] = weights.reshape(n * lq, lk).astype(attn_ref.dtype)


# ----------------------------- wrapper -------------------------------------- #

def attention_layer2(query, key, value, params):
    wq, wk, wv = params["wq"], params["wk"], params["wv"]
    bq, bk, bv = params["bq"], params["bk"], params["bv"]

    N, Lq, E = query.shape
    _, Lk, _ = key.shape
    dtype = query.dtype

    # Fold batch into the projection M dimension (pure metadata reshape).
    q2 = query.reshape(N * Lq, E)
    k2 = key.reshape(N * Lk, E)
    v2 = value.reshape(N * Lk, E)

    # Single concatenated weight / bias blocks (lane-dense vs. 3 padded tiles).
    w_cat = jnp.concatenate([wq.T, wk.T, wv.T], axis=1)           # (E, 3E)
    b_cat = jnp.concatenate([bq, bk, bv], axis=0).reshape(1, 3 * E)

    scale = 1.0 / math.sqrt(E)   # key.size(-1) == input_dim after fc_key

    kernel = functools.partial(fused_attention_kernel,
                               n=N, lq=Lq, lk=Lk, e=E, scale=scale)

    vmem = pl.BlockSpec(memory_space=pltpu.MemorySpace.VMEM)
    out2, attn2 = pl.pallas_call(
        kernel,
        out_shape=(jax.ShapeDtypeStruct((N * Lq, E), dtype),
                   jax.ShapeDtypeStruct((N * Lq, Lk), dtype)),
        in_specs=[vmem, vmem, vmem, vmem, vmem],
        out_specs=(vmem, vmem),
    )(q2, k2, v2, w_cat, b_cat)

    return out2.reshape(N, Lq, E), attn2.reshape(N, Lq, Lk)


# ----------------------------- reference ------------------------------------ #

def ref_forward(query, key, value, params):
    """Pure-jnp mirror of the PyTorch forward (for verification)."""
    q = query @ params["wq"].T + params["bq"]
    k = key @ params["wk"].T + params["bk"]
    v = value @ params["wv"].T + params["bv"]
    scores = jnp.matmul(q, jnp.swapaxes(k, -2, -1)) / math.sqrt(k.shape[-1])
    weights = jax.nn.softmax(scores, axis=-1)
    out = jnp.matmul(weights, v)
    return out, weights


# ------------------------------- main ---------------------------------------- #

if __name__ == "__main__":
    N, L, E = 2, 8, 32          # batch, seq_len, input_dim

    root = jax.random.PRNGKey(0)
    ks = jax.random.split(root, 9)
    bound = 1.0 / math.sqrt(E)  # nn.Linear-style uniform bound (deterministic)
    params = {
        "wq": jax.random.uniform(ks[0], (E, E), jnp.float32, -bound, bound),
        "bq": jax.random.uniform(ks[1], (E,), jnp.float32, -bound, bound),
        "wk": jax.random.uniform(ks[2], (E, E), jnp.float32, -bound, bound),
        "bk": jax.random.uniform(ks[3], (E,), jnp.float32, -bound, bound),
        "wv": jax.random.uniform(ks[4], (E, E), jnp.float32, -bound, bound),
        "bv": jax.random.uniform(ks[5], (E,), jnp.float32, -bound, bound),
    }
    q_in = jax.random.normal(ks[6], (N, L, E), jnp.float32)
    k_in = jax.random.normal(ks[7], (N, L, E), jnp.float32)
    v_in = jax.random.normal(ks[8], (N, L, E), jnp.float32)

    out, attn = attention_layer2(q_in, k_in, v_in, params)
    out = jax.block_until_ready(out)
    attn = jax.block_until_ready(attn)

    out_ref, attn_ref = ref_forward(q_in, k_in, v_in, params)
    assert out.shape == (N, L, E) and attn.shape == (N, L, L)
    assert jnp.allclose(out, out_ref, atol=1e-4, rtol=1e-4), "output mismatch"
    assert jnp.allclose(attn, attn_ref, atol=1e-4, rtol=1e-4), "weights mismatch"

    print("KERNEL_OK")
</pallas_src>

<mosaic_0001>
module attributes {stable_mosaic.version = 11 : i64} {
  func.func @fused_attention_kernel(%arg0: memref<16x32xf32, #tpu.memory_space<vmem>>, %arg1: memref<16x32xf32, #tpu.memory_space<vmem>>, %arg2: memref<16x32xf32, #tpu.memory_space<vmem>>, %arg3: memref<32x96xf32, #tpu.memory_space<vmem>>, %arg4: memref<1x96xf32, #tpu.memory_space<vmem>>, %arg5: memref<16x32xf32, #tpu.memory_space<vmem>>, %arg6: memref<16x8xf32, #tpu.memory_space<vmem>>) attributes {dimension_semantics = [], scalar_prefetch = 0 : i64, scratch_operands = 0 : i64, tpu.core_type = #tpu.core_type<tc>} {
    %c0 = arith.constant 0 : index
    %c0_0 = arith.constant 0 : index
    %0 = vector.load %arg3[%c0, %c0_0] : memref<32x96xf32, #tpu.memory_space<vmem>>, vector<32x96xf32>
    %c0_1 = arith.constant 0 : index
    %c0_2 = arith.constant 0 : index
    %1 = vector.load %arg4[%c0_1, %c0_2] : memref<1x96xf32, #tpu.memory_space<vmem>>, vector<1x96xf32>
    %c0_3 = arith.constant 0 : index
    %c0_4 = arith.constant 0 : index
    %2 = vector.load %arg0[%c0_3, %c0_4] : memref<16x32xf32, #tpu.memory_space<vmem>>, vector<16x32xf32>
    %3 = vector.extract_strided_slice %0 {offsets = [0, 0], sizes = [32, 32], strides = [1, 1]} : vector<32x96xf32> to vector<32x32xf32>
    %cst = arith.constant dense<0.000000e+00> : vector<16x32xf32>
    %4 = tpu.matmul %2, %3, %cst {dimension_numbers = #tpu.dot_dimension_numbers<[1], [0], [0], [1], [0, 0, 1, 1], [], []>} : vector<16x32xf32>, vector<32x32xf32>, vector<16x32xf32> -> vector<16x32xf32>
    %5 = vector.extract_strided_slice %1 {offsets = [0, 0], sizes = [1, 32], strides = [1, 1]} : vector<1x96xf32> to vector<1x32xf32>
    %6 = vector.broadcast %5 : vector<1x32xf32> to vector<16x32xf32>
    %7 = arith.addf %4, %6 : vector<16x32xf32>
    %c0_5 = arith.constant 0 : index
    %c0_6 = arith.constant 0 : index
    %8 = vector.load %arg1[%c0_5, %c0_6] : memref<16x32xf32, #tpu.memory_space<vmem>>, vector<16x32xf32>
    %9 = vector.extract_strided_slice %0 {offsets = [0, 32], sizes = [32, 32], strides = [1, 1]} : vector<32x96xf32> to vector<32x32xf32>
    %cst_7 = arith.constant dense<0.000000e+00> : vector<16x32xf32>
    %10 = tpu.matmul %8, %9, %cst_7 {dimension_numbers = #tpu.dot_dimension_numbers<[1], [0], [0], [1], [0, 0, 1, 1], [], []>} : vector<16x32xf32>, vector<32x32xf32>, vector<16x32xf32> -> vector<16x32xf32>
    %11 = vector.extract_strided_slice %1 {offsets = [0, 32], sizes = [1, 32], strides = [1, 1]} : vector<1x96xf32> to vector<1x32xf32>
    %12 = vector.broadcast %11 : vector<1x32xf32> to vector<16x32xf32>
    %13 = arith.addf %10, %12 : vector<16x32xf32>
    %c0_8 = arith.constant 0 : index
    %c0_9 = arith.constant 0 : index
    %14 = vector.load %arg2[%c0_8, %c0_9] : memref<16x32xf32, #tpu.memory_space<vmem>>, vector<16x32xf32>
    %15 = vector.extract_strided_slice %0 {offsets = [0, 64], sizes = [32, 32], strides = [1, 1]} : vector<32x96xf32> to vector<32x32xf32>
    %cst_10 = arith.constant dense<0.000000e+00> : vector<16x32xf32>
    %16 = tpu.matmul %14, %15, %cst_10 {dimension_numbers = #tpu.dot_dimension_numbers<[1], [0], [0], [1], [0, 0, 1, 1], [], []>} : vector<16x32xf32>, vector<32x32xf32>, vector<16x32xf32> -> vector<16x32xf32>
    %17 = vector.extract_strided_slice %1 {offsets = [0, 64], sizes = [1, 32], strides = [1, 1]} : vector<1x96xf32> to vector<1x32xf32>
    %18 = vector.broadcast %17 : vector<1x32xf32> to vector<16x32xf32>
    %19 = arith.addf %16, %18 : vector<16x32xf32>
    %20 = vector.shape_cast %7 : vector<16x32xf32> to vector<2x8x32xf32>
    %21 = vector.shape_cast %13 : vector<16x32xf32> to vector<2x8x32xf32>
    %22 = vector.shape_cast %19 : vector<16x32xf32> to vector<2x8x32xf32>
    "tpu.trace_start"() <{level = 10 : i32, message = "bqd,bkd->bqk"}> : () -> ()
    %cst_11 = arith.constant dense<0.000000e+00> : vector<2x8x8xf32>
    %23 = tpu.matmul %20, %21, %cst_11 {dimension_numbers = #tpu.dot_dimension_numbers<[2], [2], [1], [1], [0, 0, 0, 1, 1, 1], [0], [0]>} : vector<2x8x32xf32>, vector<2x8x32xf32>, vector<2x8x8xf32> -> vector<2x8x8xf32>
    "tpu.trace_stop"() : () -> ()
    %cst_12 = arith.constant 0.176776692 : f32
    %24 = vector.broadcast %cst_12 : f32 to vector<2x8x8xf32>
    %25 = arith.mulf %23, %24 : vector<2x8x8xf32>
    %cst_13 = arith.constant dense<0xFF800000> : vector<2x8xf32>
    %26 = vector.multi_reduction <maximumf>, %25, %cst_13 [2] : vector<2x8x8xf32> to vector<2x8xf32>
    %27 = vector.shape_cast %26 : vector<2x8xf32> to vector<2x8x1xf32>
    %28 = vector.broadcast %27 : vector<2x8x1xf32> to vector<2x8x8xf32>
    %29 = arith.subf %25, %28 : vector<2x8x8xf32>
    %30 = math.exp %29 : vector<2x8x8xf32>
    %cst_14 = arith.constant dense<0.000000e+00> : vector<2x8xf32>
    %31 = vector.multi_reduction <add>, %30, %cst_14 [2] : vector<2x8x8xf32> to vector<2x8xf32>
    %32 = vector.shape_cast %31 : vector<2x8xf32> to vector<2x8x1xf32>
    %33 = tpu.reciprocal %32 : vector<2x8x1xf32> -> vector<2x8x1xf32>
    %34 = vector.broadcast %33 : vector<2x8x1xf32> to vector<2x8x8xf32>
    %35 = arith.mulf %30, %34 : vector<2x8x8xf32>
    "tpu.trace_start"() <{level = 10 : i32, message = "bqk,bkd->bqd"}> : () -> ()
    %cst_15 = arith.constant dense<0.000000e+00> : vector<2x8x32xf32>
    %36 = tpu.matmul %35, %22, %cst_15 {dimension_numbers = #tpu.dot_dimension_numbers<[2], [1], [1], [2], [0, 0, 0, 1, 1, 2], [0], [0]>} : vector<2x8x8xf32>, vector<2x8x32xf32>, vector<2x8x32xf32> -> vector<2x8x32xf32>
    "tpu.trace_stop"() : () -> ()
    %37 = vector.shape_cast %36 : vector<2x8x32xf32> to vector<16x32xf32>
    %c0_16 = arith.constant 0 : index
    %c0_17 = arith.constant 0 : index
    %38 = vector.load %arg5[%c0_16, %c0_17] : memref<16x32xf32, #tpu.memory_space<vmem>>, vector<16x32xf32>
    tpu.vector_store %arg5[%c0_16, %c0_17], %37 {strides = array<i32>} : memref<16x32xf32, #tpu.memory_space<vmem>>, vector<16x32xf32>,
    %39 = vector.shape_cast %35 : vector<2x8x8xf32> to vector<16x8xf32>
    %c0_18 = arith.constant 0 : index
    %c0_19 = arith.constant 0 : index
    %40 = vector.load %arg6[%c0_18, %c0_19] : memref<16x8xf32, #tpu.memory_space<vmem>>, vector<16x8xf32>
    tpu.vector_store %arg6[%c0_18, %c0_19], %39 {strides = array<i32>} : memref<16x8xf32, #tpu.memory_space<vmem>>, vector<16x8xf32>,
    return
  }
}

</mosaic_0001>

<llo_original>
// kernel: tpu_custom_call.1
$region0: #{tpu_custom_call.1}
  #allocation0 [shape = 'u32[]', space=smem, size = 0x4, offset = 0x4, fixed_abs, tag = 'smem constant byte address 0x4 - core index']
  #allocation1 [shape = 'u32[72,128]{1,0:T(1,128)}', space=vmem, size = 0x9000, scoped, tag = 'internal scratch']
  %s0 = inlined_call_operand.hbm [shape: f32[16,32], index: 0, kind: input, shape index: {}]
  %s1 = inlined_call_operand.hbm [shape: f32[16,32], index: 1, kind: input, shape index: {}]
  %s2 = inlined_call_operand.hbm [shape: f32[16,32], index: 2, kind: input, shape index: {}]
  %s3 = inlined_call_operand.hbm [shape: f32[32,96], index: 3, kind: input, shape index: {}]
  %s4 = inlined_call_operand.vmem [shape: f32[1,96], index: 4, kind: input, shape index: {}]
  %s5 = inlined_call_operand.hbm [shape: f32[16,32], index: 5, kind: output, shape index: {0}]
  %s6 = inlined_call_operand.vmem [shape: f32[16,8], index: 6, kind: output, shape index: {1}]
  %7 = xla_tuple %s5, %s6
  %s8 = sld [smem:[#allocation0]]
  $region54: #{tpu_custom_call.1} parent=0
    _
  %s10 = ssub.s32 1, %s8
  %s11 = scalar_select 0, %s10, %s8
  $region1: #{tpu_custom_call.1} parent=0
    #allocation2 [shape = 'u8[8192]{0}', space=vmem, size = 0x2000, scoped, tag = 'input window, operand 0, single buffered']
    #allocation3 [shape = 's32[1]{0}', space=sflag, size = 0x4, scoped, tag = 'scoped memory for tpu_custom_call.1']
    #allocation4 [shape = 's32[1]{0}', space=sflag, size = 0x4, scoped, tag = 'scoped memory for tpu_custom_call.1']
    #allocation5 [shape = 'u8[8192]{0}', space=vmem, size = 0x2000, scoped, tag = 'input window, operand 1, single buffered']
    #allocation6 [shape = 's32[1]{0}', space=sflag, size = 0x4, scoped, tag = 'scoped memory for tpu_custom_call.1']
    #allocation7 [shape = 'u8[8192]{0}', space=vmem, size = 0x2000, scoped, tag = 'input window, operand 2, single buffered']
    #allocation8 [shape = 'u8[16384]{0}', space=vmem, size = 0x4000, scoped, tag = 'input window, operand 3, single buffered']
    #allocation9 [shape = 's32[1]{0}', space=sflag, size = 0x4, scoped, tag = 'scoped memory for tpu_custom_call.1']
    #allocation10 [shape = 'u8[8192]{0}', space=vmem, size = 0x2000, scoped, tag = 'output window, operand 0, single buffered']
    %12 = vsyncpa [#allocation3], 0
    %13 = vsyncpa [#allocation6], 0
    %14 = vsyncpa [#allocation9], 0
    %15 = vsyncpa [#allocation4], 0
    // Predicated region
    $region2: #{tpu_custom_call.1} parent=1 // pred_check
      _
    $region3: #{tpu_custom_call.1} parent=1 // pred_check_branch
      %17 = sbr.rel (0) target = $region5
    $region4: #{tpu_custom_call.1} parent=1 // pred_region
      %19 = vsyncadd [#allocation3], 0
      %s20 = sshll.u32 %s0, 4
      %s21 = int_to_ptr.hbm [resolvable:$true] %s20
      %s22 = sshll.u32 [#allocation2], 4
      %s23 = int_to_ptr.vmem [resolvable:$true] %s22
      %28 = dma.hbm_to_vmem [thread:$0]  %s21, 256, %s23, [#allocation3], 128, 128, 8
    $region5: #{tpu_custom_call.1} parent=1 // pred_fallthru
      _
    // Predicated region
    $region6: #{tpu_custom_call.1} parent=1 // pred_check
      _
    $region7: #{tpu_custom_call.1} parent=1 // pred_check_branch
      %30 = sbr.rel (0) target = $region9
    $region8: #{tpu_custom_call.1} parent=1 // pred_region
      %32 = vsyncadd [#allocation6], 0
      %s33 = sshll.u32 %s1, 4
      %s34 = int_to_ptr.hbm [resolvable:$true] %s33
      %s35 = sshll.u32 [#allocation5], 4
      %s36 = int_to_ptr.vmem [resolvable:$true] %s35
      %41 = dma.hbm_to_vmem [thread:$0]  %s34, 256, %s36, [#allocation6], 128, 128, 8
    $region9: #{tpu_custom_call.1} parent=1 // pred_fallthru
      _
    // Predicated region
    $region10: #{tpu_custom_call.1} parent=1 // pred_check
      _
    $region11: #{tpu_custom_call.1} parent=1 // pred_check_branch
      %43 = sbr.rel (0) target = $region13
    $region12: #{tpu_custom_call.1} parent=1 // pred_region
      %45 = vsyncadd [#allocation6], 0
      %s46 = sshll.u32 %s2, 4
      %s47 = int_to_ptr.hbm [resolvable:$true] %s46
      %s48 = sshll.u32 [#allocation7], 4
      %s49 = int_to_ptr.vmem [resolvable:$true] %s48
      %54 = dma.hbm_to_vmem [thread:$0]  %s47, 256, %s49, [#allocation6], 128, 128, 8
    $region13: #{tpu_custom_call.1} parent=1 // pred_fallthru
      _
    // Predicated region
    $region14: #{tpu_custom_call.1} parent=1 // pred_check
      _
    $region15: #{tpu_custom_call.1} parent=1 // pred_check_branch
      %56 = sbr.rel (0) target = $region17
    $region16: #{tpu_custom_call.1} parent=1 // pred_region
      %58 = vsyncadd [#allocation9], 0
      %s59 = sshll.u32 %s3, 4
      %s60 = int_to_ptr.hbm [resolvable:$true] %s59
      %s61 = sshll.u32 [#allocation8], 4
      %s62 = int_to_ptr.vmem [resolvable:$true] %s61
      %67 = dma.hbm_to_vmem [thread:$0]  %s60, 512, %s62, [#allocation9], 128, 128, 8
    $region17: #{tpu_custom_call.1} parent=1 // pred_fallthru
      _
    // Predicated region
    $region18: #{tpu_custom_call.1} parent=1 // pred_check
      _
    $region19: #{tpu_custom_call.1} parent=1 // pred_check_branch
      %69 = sbr.rel (0) target = $region21
    $region20: #{tpu_custom_call.1} parent=1 // pred_region
      _
    $region21: #{tpu_custom_call.1} parent=1 // pred_fallthru
      _
    // Predicated region
    $region22: #{tpu_custom_call.1} parent=1 // pred_check
      _
    $region23: #{tpu_custom_call.1} parent=1 // pred_check_branch
      %71 = sbr.rel (0) target = $region25
    $region24: #{tpu_custom_call.1} parent=1 // pred_region
      %73 = dma.done [#allocation3], 256
    $region25: #{tpu_custom_call.1} parent=1 // pred_fallthru
      _
    // Predicated region
    $region26: #{tpu_custom_call.1} parent=1 // pred_check
      _
    $region27: #{tpu_custom_call.1} parent=1 // pred_check_branch
      %75 = sbr.rel (0) target = $region29
    $region28: #{tpu_custom_call.1} parent=1 // pred_region
      %77 = dma.done [#allocation6], 256
    $region29: #{tpu_custom_call.1} parent=1 // pred_fallthru
      _
    // Predicated region
    $region30: #{tpu_custom_call.1} parent=1 // pred_check
      _
    $region31: #{tpu_custom_call.1} parent=1 // pred_check_branch
      %79 = sbr.rel (0) target = $region33
    $region32: #{tpu_custom_call.1} parent=1 // pred_region
      %81 = dma.done [#allocation6], 256
    $region33: #{tpu_custom_call.1} parent=1 // pred_fallthru
      _
    // Predicated region
    $region34: #{tpu_custom_call.1} parent=1 // pred_check
      _
    $region35: #{tpu_custom_call.1} parent=1 // pred_check_branch
      %83 = sbr.rel (0) target = $region37
    $region36: #{tpu_custom_call.1} parent=1 // pred_region
      %85 = dma.done [#allocation9], 512
    $region37: #{tpu_custom_call.1} parent=1 // pred_fallthru
      _
    %v86 = vld [vmem:[#allocation8] sm:$0xff]
    %v87 = vld [vmem:[#allocation8 + $0x8] sm:$0xff]
    %v88 = vld [vmem:[#allocation8 + $0x10] sm:$0xff]
    %v89 = vld [vmem:[#allocation8 + $0x18] sm:$0xff]
    %v90 = vld [vmem:[%s4] sm:$0x1]
    %v91 = vld [vmem:[#allocation2] sm:$0xff]
    %v92 = vld [vmem:[#allocation2 + $0x8] sm:$0xff]
    %v94 = vperm.slane %v90, 0
    %vm96 = vcmask 261120
    %v98 = vsel %vm96, %v91, 0
    %v101 = vsel %vm96, %v92, 0
    %103 = vmatpush.msra.mxu0 0.0
    %104 = vmatpush.msra.mxu0 0.0
    %105 = vmatpush.msra.mxu0 0.0
    %106 = vmatpush.msra.mxu0 0.0
    %107 = vmatpush.msra.mxu0 0.0
    %108 = vmatpush.msra.mxu0 0.0
    %109 = vmatpush.msra.mxu0 0.0
    %110 = vmatpush.msra.mxu0 0.0
    %111 = vmatpush.msra.mxu0 0.0
    %112 = vmatpush.msra.mxu0 0.0
    %113 = vmatpush.msra.mxu0 0.0
    %114 = vmatpush.msra.mxu0 0.0
    %115 = vmatpush.msra.mxu0 %v89
    %116 = vmatpush.msra.mxu0 %v88
    %117 = vmatpush.msra.mxu0 %v87
    %118 = vmatpush.msra.mxu0 %v86
    %119 = vmatmul.f32.gmra.mxu0 %v98
    %v120 = vpop.f32.mrf.mxu0
    %v121 = vadd.f32 %v94, %v120
    %122 = vmatmul.f32.gmra.mxu0 %v101
    %v123 = vpop.f32.mrf.mxu0
    %v124 = vadd.f32 %v94, %v123
    %125 = vdwg.mxu0
    %v126 = vld [vmem:[#allocation5] sm:$0xff]
    %v127 = vld [vmem:[#allocation5 + $0x8] sm:$0xff]
    %132 = vrot.lane.b32.xlu0 %v86, 96
    %v133 = vpop.permute.xlu0 %132
    %134 = vrot.lane.b32.xlu0 %v87, 96
    %v135 = vpop.permute.xlu0 %134
    %136 = vrot.lane.b32.xlu0 %v88, 96
    %v137 = vpop.permute.xlu0 %136
    %138 = vrot.lane.b32.xlu0 %v89, 96
    %v139 = vpop.permute.xlu0 %138
    %144 = vrot.lane.b32.xlu0 %v94, 96
    %v145 = vpop.permute.xlu0 %144
    %v148 = vsel %vm96, %v126, 0
    %v151 = vsel %vm96, %v127, 0
    %153 = vmatpush.msra.mxu0 0.0
    %154 = vmatpush.msra.mxu0 0.0
    %155 = vmatpush.msra.mxu0 0.0
    %156 = vmatpush.msra.mxu0 0.0
    %157 = vmatpush.msra.mxu0 0.0
    %158 = vmatpush.msra.mxu0 0.0
    %159 = vmatpush.msra.mxu0 0.0
    %160 = vmatpush.msra.mxu0 0.0
    %161 = vmatpush.msra.mxu0 0.0
    %162 = vmatpush.msra.mxu0 0.0
    %163 = vmatpush.msra.mxu0 0.0
    %164 = vmatpush.msra.mxu0 0.0
    %165 = vmatpush.msra.mxu0 %v139
    %166 = vmatpush.msra.mxu0 %v137
    %167 = vmatpush.msra.mxu0 %v135
    %168 = vmatpush.msra.mxu0 %v133
    %169 = vmatmul.f32.gmra.mxu0 %v148
    %v170 = vpop.f32.mrf.mxu0
    %v171 = vadd.f32 %v145, %v170
    %172 = vmatmul.f32.gmra.mxu0 %v151
    %v173 = vpop.f32.mrf.mxu0
    %v174 = vadd.f32 %v145, %v173
    %175 = vdwg.mxu0
    %v176 = vld [vmem:[#allocation7] sm:$0xff]
    %v177 = vld [vmem:[#allocation7 + $0x8] sm:$0xff]
    %178 = vrot.lane.b32.xlu0 %v86, 64
    %v179 = vpop.permute.xlu0 %178
    %180 = vrot.lane.b32.xlu0 %v87, 64
    %v181 = vpop.permute.xlu0 %180
    %182 = vrot.lane.b32.xlu0 %v88, 64
    %v183 = vpop.permute.xlu0 %182
    %184 = vrot.lane.b32.xlu0 %v89, 64
    %v185 = vpop.permute.xlu0 %184
    %190 = vrot.lane.b32.xlu0 %v94, 64
    %v191 = vpop.permute.xlu0 %190
    %v194 = vsel %vm96, %v176, 0
    %v197 = vsel %vm96, %v177, 0
    %199 = vmatpush.msra.mxu0 0.0
    %200 = vmatpush.msra.mxu0 0.0
    %201 = vmatpush.msra.mxu0 0.0
    %202 = vmatpush.msra.mxu0 0.0
    %203 = vmatpush.msra.mxu0 0.0
    %204 = vmatpush.msra.mxu0 0.0
    %205 = vmatpush.msra.mxu0 0.0
    %206 = vmatpush.msra.mxu0 0.0
    %207 = vmatpush.msra.mxu0 0.0
    %208 = vmatpush.msra.mxu0 0.0
    %209 = vmatpush.msra.mxu0 0.0
    %210 = vmatpush.msra.mxu0 0.0
    %211 = vmatpush.msra.mxu0 %v185
    %212 = vmatpush.msra.mxu0 %v183
    %213 = vmatpush.msra.mxu0 %v181
    %214 = vmatpush.msra.mxu0 %v179
    %215 = vmatmul.f32.gmra.mxu0 %v194
    %v216 = vpop.f32.mrf.mxu0
    %v217 = vadd.f32 %v191, %v216
    %218 = vmatmul.f32.gmra.mxu0 %v197
    %v219 = vpop.f32.mrf.mxu0
    %v220 = vadd.f32 %v191, %v219
    %221 = vdwg.mxu0
    %v223 = vsel %vm96, %v121, 0
    %v226 = vsel %vm96, %v171, 0
    %228 = vmatpush.xpose.msra.mxu0 0.0
    %229 = vmatpush.xpose.msra.mxu0 0.0
    %230 = vmatpush.xpose.msra.mxu0 0.0
    %231 = vmatpush.xpose.msra.mxu0 0.0
    %232 = vmatpush.xpose.msra.mxu0 0.0
    %233 = vmatpush.xpose.msra.mxu0 0.0
    %234 = vmatpush.xpose.msra.mxu0 0.0
    %235 = vmatpush.xpose.msra.mxu0 0.0
    %236 = vmatpush.xpose.msra.mxu0 0.0
    %237 = vmatpush.xpose.msra.mxu0 0.0
    %238 = vmatpush.xpose.msra.mxu0 0.0
    %239 = vmatpush.xpose.msra.mxu0 0.0
    %240 = vmatpush.xpose.msra.mxu0 0.0
    %241 = vmatpush.xpose.msra.mxu0 0.0
    %242 = vmatpush.xpose.msra.mxu0 0.0
    %243 = vmatpush.xpose.msra.mxu0 %v226
    %244 = vmatmul.f32.gmra.mxu0 %v223
    %v245 = vpop.f32.mrf.mxu0
    %v246 = vadd.f32 0.0, %v245
    %247 = vdwg.mxu0
    %v249 = vsel %vm96, %v124, 0
    %v252 = vsel %vm96, %v174, 0
    %254 = vmatpush.xpose.msra.mxu0 0.0
    %255 = vmatpush.xpose.msra.mxu0 0.0
    %256 = vmatpush.xpose.msra.mxu0 0.0
    %257 = vmatpush.xpose.msra.mxu0 0.0
    %258 = vmatpush.xpose.msra.mxu0 0.0
    %259 = vmatpush.xpose.msra.mxu0 0.0
    %260 = vmatpush.xpose.msra.mxu0 0.0
    %261 = vmatpush.xpose.msra.mxu0 0.0
    %262 = vmatpush.xpose.msra.mxu0 0.0
    %263 = vmatpush.xpose.msra.mxu0 0.0
    %264 = vmatpush.xpose.msra.mxu0 0.0
    %265 = vmatpush.xpose.msra.mxu0 0.0
    %266 = vmatpush.xpose.msra.mxu0 0.0
    %267 = vmatpush.xpose.msra.mxu0 0.0
    %268 = vmatpush.xpose.msra.mxu0 0.0
    %269 = vmatpush.xpose.msra.mxu0 %v252
    %270 = vmatmul.f32.gmra.mxu0 %v249
    %v271 = vpop.f32.mrf.mxu0
    %v272 = vadd.f32 0.0, %v271
    %273 = vdwg.mxu0
    %v274 = vmul.f32 %v246, 0.17677669
    %v275 = vmul.f32 %v272, 0.17677669
    %vm276 = vcmask 64512
    %v277 = vsel %vm276, %v274, -inf
    %278 = vmax.xlane.f32.xlu0 %v277
    %v279 = vpop.xlane.xlu0 %278
    %v280 = vsel %vm276, %v275, -inf
    %281 = vmax.xlane.f32.xlu0 %v280
    %v282 = vpop.xlane.xlu0 %281
    %v283 = vsub.f32 %v274, %v279
    %v284 = vsub.f32 %v275, %v282
    %v285 = vmul.f32 %v283, 1.442695
    %v286 = vpow.pop %v285
    %v287 = vmul.f32 %v284, 1.442695
    %v288 = vpow.pop %v287
    %v289 = vsel %vm276, %v286, 0.0
    %290 = vadd.xlane.f32.xlu0 %v289
    %v291 = vpop.xlane.xlu0 %290
    %v292 = vsel %vm276, %v288, 0.0
    %293 = vadd.xlane.f32.xlu0 %v292
    %v294 = vpop.xlane.xlu0 %293
    %v295 = vrcp.pop %v291
    %v296 = vmul.f32 %v291, %v295
    %v297 = vsub.f32 1.0, %v296
    %v298 = vmul.f32 %v295, %v297
    %v299 = vadd.f32 %v295, %v298
    %vm300 = vweird.f32 %v291
    %vm301 = vweird.f32 %v295
    %vm302 = vmor %vm300, %vm301
    %v303 = vsel %vm302, %v295, %v299
    %v304 = vand.u32 2147483647, %v291
    %vm305 = vcmp.eq.f32.partialorder %v304, 8.507059e+37
    %v306 = vand.u32 %v291, 2147483648
    %v307 = vor.u32 1.1754944e-38, %v306
    %v308 = vsel %vm305, %v307, %v303
    %v309 = vrcp.pop %v294
    %v310 = vmul.f32 %v294, %v309
    %v311 = vsub.f32 1.0, %v310
    %v312 = vmul.f32 %v309, %v311
    %v313 = vadd.f32 %v309, %v312
    %vm314 = vweird.f32 %v294
    %vm315 = vweird.f32 %v309
    %vm316 = vmor %vm314, %vm315
    %v317 = vsel %vm316, %v309, %v313
    %v318 = vand.u32 2147483647, %v294
    %vm319 = vcmp.eq.f32.partialorder %v318, 8.507059e+37
    %v320 = vand.u32 %v294, 2147483648
    %v321 = vor.u32 1.1754944e-38, %v320
    %v322 = vsel %vm319, %v321, %v317
    %v323 = vmul.f32 %v286, %v308
    %v324 = vmul.f32 %v288, %v322
    %v326 = vsel %vm276, %v323, 0
    %328 = vmatpush.msra.mxu0 0.0
    %329 = vmatpush.msra.mxu0 0.0
    %330 = vmatpush.msra.mxu0 0.0
    %331 = vmatpush.msra.mxu0 0.0
    %332 = vmatpush.msra.mxu0 0.0
    %333 = vmatpush.msra.mxu0 0.0
    %334 = vmatpush.msra.mxu0 0.0
    %335 = vmatpush.msra.mxu0 0.0
    %336 = vmatpush.msra.mxu0 0.0
    %337 = vmatpush.msra.mxu0 0.0
    %338 = vmatpush.msra.mxu0 0.0
    %339 = vmatpush.msra.mxu0 0.0
    %340 = vmatpush.msra.mxu0 0.0
    %341 = vmatpush.msra.mxu0 0.0
    %342 = vmatpush.msra.mxu0 0.0
    %343 = vmatpush.msra.mxu0 %v217
    %344 = vmatmul.f32.gmra.mxu0 %v326
    %v345 = vpop.f32.mrf.mxu0
    %v346 = vadd.f32 0.0, %v345
    %347 = vdwg.mxu0
    %v349 = vsel %vm276, %v324, 0
    %351 = vmatpush.msra.mxu0 0.0
    %352 = vmatpush.msra.mxu0 0.0
    %353 = vmatpush.msra.mxu0 0.0
    %354 = vmatpush.msra.mxu0 0.0
    %355 = vmatpush.msra.mxu0 0.0
    %356 = vmatpush.msra.mxu0 0.0
    %357 = vmatpush.msra.mxu0 0.0
    %358 = vmatpush.msra.mxu0 0.0
    %359 = vmatpush.msra.mxu0 0.0
    %360 = vmatpush.msra.mxu0 0.0
    %361 = vmatpush.msra.mxu0 0.0
    %362 = vmatpush.msra.mxu0 0.0
    %363 = vmatpush.msra.mxu0 0.0
    %364 = vmatpush.msra.mxu0 0.0
    %365 = vmatpush.msra.mxu0 0.0
    %366 = vmatpush.msra.mxu0 %v220
    %367 = vmatmul.f32.gmra.mxu0 %v349
    %v368 = vpop.f32.mrf.mxu0
    %v369 = vadd.f32 0.0, %v368
    %370 = vdwg.mxu0
    %371 = vst.msk [vmem:[#allocation10] sm:$0xff] %vm96, %v346
    %372 = vst.msk [vmem:[#allocation10 + $0x8] sm:$0xff] %vm96, %v369
    %373 = vst.msk [vmem:[%s6] sm:$0xff] %vm276, %v323
    %374 = vst.msk [vmem:[%s6 + $0x8] sm:$0xff] %vm276, %v324
    // Predicated region
    $region38: #{tpu_custom_call.1} parent=1 // pred_check
      _
    $region39: #{tpu_custom_call.1} parent=1 // pred_check_branch
      %376 = sbr.rel (0) target = $region41
    $region40: #{tpu_custom_call.1} parent=1 // pred_region
      %378 = vsyncadd [#allocation4], 0
      %s379 = sshll.u32 [#allocation10], 4
      %s380 = int_to_ptr.vmem [resolvable:$true] %s379
      %s381 = sshll.u32 %s5, 4
      %s382 = int_to_ptr.hbm [resolvable:$true] %s381
      %387 = dma.vmem_to_hbm [thread:$0]  %s380, 256, %s382, [#allocation4], 128, 128, 8
    $region41: #{tpu_custom_call.1} parent=1 // pred_fallthru
      _
    // Predicated region
    $region42: #{tpu_custom_call.1} parent=1 // pred_check
      _
    $region43: #{tpu_custom_call.1} parent=1 // pred_check_branch
      %389 = sbr.rel (0) target = $region45
    $region44: #{tpu_custom_call.1} parent=1 // pred_region
      _
    $region45: #{tpu_custom_call.1} parent=1 // pred_fallthru
      _
    // Predicated region
    $region46: #{tpu_custom_call.1} parent=1 // pred_check
      _
    $region47: #{tpu_custom_call.1} parent=1 // pred_check_branch
      %391 = sbr.rel (0) target = $region49
    $region48: #{tpu_custom_call.1} parent=1 // pred_region
      %393 = dma.done [#allocation4], 256
    $region49: #{tpu_custom_call.1} parent=1 // pred_fallthru
      _
    // Predicated region
    $region50: #{tpu_custom_call.1} parent=1 // pred_check
      _
    $region51: #{tpu_custom_call.1} parent=1 // pred_check_branch
      %395 = sbr.rel (0) target = $region53
    $region52: #{tpu_custom_call.1} parent=1 // pred_region
      _
    $region53: #{tpu_custom_call.1} parent=1 // pred_fallthru
      _
    %396 = vsyncpa [#allocation3], 1
    %397 = vsyncpa [#allocation6], 1
    %398 = vsyncpa [#allocation9], 1
    %399 = vsyncpa [#allocation4], 1

</llo_original>
